<compile_context>
chip_gen: v6e
topology: v6e:2x2x1
jax: 0.10.0
libtpu: 0.0.40
codegen_flags: <defaults>
</compile_context>

<pallas_src>
import functools

import jax
import jax.numpy as jnp
from jax.experimental import pallas as pl
from jax.experimental.pallas import tpu as pltpu

# Below this many elements, pallas_call fixed overhead dominates; XLA's fused
# elementwise is as fast or faster.
_SMALL_TOTAL = 1 << 19  # 512K elements

# Lane-dense column candidates (multiples of 128).  First one that divides the
# element count gives a zero-copy reshape; otherwise we pad once.
_COL_CANDIDATES = (2048, 4096, 1024, 512, 256, 128)


def _fuzzy_kernel(x_ref, o_ref, *, a, inv_ba, d, inv_dc):
    x = x_ref[...]
    rising = (x - a) * inv_ba     # (x - a) / (b - a)
    falling = (d - x) * inv_dc    # (d - x) / (d - c)
    # scalar 0.0 -> no full-vreg zeros materialization
    o_ref[...] = jnp.maximum(jnp.minimum(rising, falling), 0.0)


def fuzzy_membership(x, a, b, c, d, *, lane=2048):
    """Trapezoidal fuzzy membership, elementwise over x (any shape).

    a, b, c, d: Python scalars (as in the nn.Module __init__), a < b <= c < d.
    """
    a = float(a); b = float(b); c = float(c); d = float(d)
    if b == a or d == c:
        raise ValueError("degenerate trapezoid: need b != a and d != c")
    inv_ba = 1.0 / (b - a)
    inv_dc = 1.0 / (d - c)

    orig_shape = x.shape
    total = int(x.size)
    if total == 0:
        return x

    # ---- small-tensor fast path: fused XLA elementwise, no pallas overhead.
    if total < _SMALL_TOTAL:
        return jnp.maximum(
            jnp.minimum((x - a) / (b - a), (d - x) / (d - c)), 0.0
        ).astype(x.dtype)

    itemsize = jnp.dtype(x.dtype).itemsize

    # ---- pick a lane-dense column count; zero-copy reshape when possible.
    cols = None
    for cand in _COL_CANDIDATES:
        if total % cand == 0:
            cols = cand
            break

    flat = x.reshape(-1)
    if cols is None:
        # Rare fallback: one pad (and one final slice) to a multiple of `lane`.
        cols = lane
        padded = pl.cdiv(total, cols) * cols
        flat = jnp.pad(flat, (0, padded - total))
    else:
        padded = total
    rows = padded // cols
    x2d = flat.reshape(rows, cols)

    # Sublane multiple for this dtype (8 for f32, 16 for bf16, 32 for int8).
    sub = max(8, 32 // itemsize)
    # ~4 MiB per block ...
    target_rows = max(sub, ((4 * 1024 * 1024 // itemsize) // cols) // sub * sub)
    # ... but keep >= ~8 grid steps so v7x's two TCs / the DMA pipeline stay fed.
    steps_cap = max(sub, (rows // 8) // sub * sub)
    block_rows = min(rows, target_rows, steps_cap)

    # No row padding: Pallas clips/masks the partial last row-block.
    grid = (pl.cdiv(rows, block_rows),)

    kernel = functools.partial(_fuzzy_kernel, a=a, inv_ba=inv_ba, d=d, inv_dc=inv_dc)

    out2d = pl.pallas_call(
        kernel,
        out_shape=jax.ShapeDtypeStruct((rows, cols), x.dtype),
        grid_spec=pltpu.PrefetchScalarGridSpec(
            num_scalar_prefetch=0,
            grid=grid,
            in_specs=[pl.BlockSpec((block_rows, cols), lambda i: (i, 0))],
            out_specs=pl.BlockSpec((block_rows, cols), lambda i: (i, 0)),
        ),
        compiler_params=pltpu.CompilerParams(
            dimension_semantics=("parallel",),
            # 4 live ~4 MiB buffers (in + out, double-buffered) ~= 16 MiB.
            # 32 MiB is safe on v5e/v6e/v7x and above v5e's 16 MiB default.
            vmem_limit_bytes=32 * 1024 * 1024,
        ),
        cost_estimate=pl.CostEstimate(
            flops=6 * total,
            transcendentals=0,
            bytes_accessed=2 * total * itemsize,
        ),
    )(x2d)

    out_flat = out2d.reshape(-1)
    if padded != total:
        out_flat = out_flat[:total]
    return out_flat.reshape(orig_shape)


def fuzzy_membership_ref(x, a, b, c, d):
    """Pure-JAX reference mirroring the PyTorch forward exactly."""
    return jnp.maximum(jnp.minimum((x - a) / (b - a), (d - x) / (d - c)), 0.0)


if __name__ == "__main__":
    # Deterministic trapezoid parameters (a < b <= c < d).
    a, b, c, d = 0.1, 0.4, 0.6, 0.9

    # 1) Small NCHW input consistent with the module (attention-map-like
    #    feature tensor) — exercises the fused-XLA fast path.
    x_small = jax.random.uniform(jax.random.PRNGKey(0), (2, 4, 16, 16), dtype=jnp.float32)
    out_small = jax.block_until_ready(fuzzy_membership(x_small, a, b, c, d))
    ref_small = fuzzy_membership_ref(x_small, a, b, c, d)
    assert out_small.shape == x_small.shape and out_small.dtype == x_small.dtype
    assert jnp.allclose(out_small, ref_small, atol=1e-6, rtol=1e-6), "mismatch (small)"

    # 2) Mid-size tensor: Pallas path, zero-copy lane-dense reshape
    #    (655360 = 320 * 2048), multi-step grid (8 steps of 40x2048 blocks).
    x_mid = jax.random.uniform(jax.random.PRNGKey(1), (4, 8, 128, 160), dtype=jnp.float32)
    out_mid = jax.block_until_ready(fuzzy_membership(x_mid, a, b, c, d))
    ref_mid = fuzzy_membership_ref(x_mid, a, b, c, d)
    # Note: kernel multiplies by precomputed reciprocals vs. reference division
    # (~1 ulp difference), well within the tolerance below.
    assert jnp.allclose(out_mid, ref_mid, atol=1e-6, rtol=1e-6), "mismatch (mid)"

    # 3) Element count not divisible by 128: exercises the padded fallback and
    #    the masked partial last row-block.
    x_odd = jax.random.uniform(jax.random.PRNGKey(2), (3, 431, 599), dtype=jnp.float32)
    out_odd = jax.block_until_ready(fuzzy_membership(x_odd, a, b, c, d))
    ref_odd = fuzzy_membership_ref(x_odd, a, b, c, d)
    assert out_odd.shape == x_odd.shape and out_odd.dtype == x_odd.dtype
    assert jnp.allclose(out_odd, ref_odd, atol=1e-6, rtol=1e-6), "mismatch (odd)"

    print("KERNEL_OK")
</pallas_src>

<mosaic_0001>
module attributes {stable_mosaic.version = 11 : i64} {
  func.func @_fuzzy_kernel(%arg0: i32, %arg1: memref<40x2048xf32, #tpu.memory_space<vmem>>, %arg2: memref<40x2048xf32, #tpu.memory_space<vmem>>) attributes {dimension_semantics = [#tpu.dimension_semantics<parallel>], iteration_bounds = array<i64: 8>, scalar_prefetch = 0 : i64, scratch_operands = 0 : i64, tpu.core_type = #tpu.core_type<tc>, window_params = [{transform_indices = @transform_0, window_bounds = array<i64: 40, 2048>}, {transform_indices = @transform_1, window_bounds = array<i64: 40, 2048>}]} {
    %c0 = arith.constant 0 : index
    %c0_0 = arith.constant 0 : index
    %0 = vector.load %arg1[%c0, %c0_0] : memref<40x2048xf32, #tpu.memory_space<vmem>>, vector<40x2048xf32>
    %cst = arith.constant 1.000000e-01 : f32
    %1 = vector.broadcast %cst : f32 to vector<40x2048xf32>
    %2 = arith.subf %0, %1 : vector<40x2048xf32>
    %cst_1 = arith.constant 3.33333325 : f32
    %3 = vector.broadcast %cst_1 : f32 to vector<40x2048xf32>
    %4 = arith.mulf %2, %3 : vector<40x2048xf32>
    %cst_2 = arith.constant 0.899999976 : f32
    %5 = vector.broadcast %cst_2 : f32 to vector<40x2048xf32>
    %6 = arith.subf %5, %0 : vector<40x2048xf32>
    %cst_3 = arith.constant 3.33333325 : f32
    %7 = vector.broadcast %cst_3 : f32 to vector<40x2048xf32>
    %8 = arith.mulf %6, %7 : vector<40x2048xf32>
    %9 = arith.minimumf %4, %8 : vector<40x2048xf32>
    %cst_4 = arith.constant 0.000000e+00 : f32
    %10 = vector.broadcast %cst_4 : f32 to vector<40x2048xf32>
    %11 = arith.maximumf %9, %10 : vector<40x2048xf32>
    %c0_5 = arith.constant 0 : index
    %c0_6 = arith.constant 0 : index
    %12 = vector.load %arg2[%c0_5, %c0_6] : memref<40x2048xf32, #tpu.memory_space<vmem>>, vector<40x2048xf32>
    tpu.vector_store %arg2[%c0_5, %c0_6], %11 {strides = array<i32>} : memref<40x2048xf32, #tpu.memory_space<vmem>>, vector<40x2048xf32>,
    return
  }
  func.func @transform_0(%arg0: i32) -> (i32, i32) {
    %c0_i32 = arith.constant 0 : i32
    %c0_i32_0 = arith.constant 0 : i32
    return %arg0, %c0_i32 : i32, i32
  }
  func.func @transform_1(%arg0: i32) -> (i32, i32) {
    %c0_i32 = arith.constant 0 : i32
    %c0_i32_0 = arith.constant 0 : i32
    return %arg0, %c0_i32 : i32, i32
  }
}

</mosaic_0001>

<llo_original>
// kernel: tpu_custom_call.1
$region0: #{tpu_custom_call.1}
  #allocation0 [shape = 'u32[]', space=smem, size = 0x4, offset = 0x4, fixed_abs, tag = 'smem constant byte address 0x4 - core index']
  #allocation1 [shape = 'u32[144,128]{1,0:T(1,128)}', space=vmem, size = 0x12000, scoped, tag = 'internal scratch']
  %s0 = inlined_call_operand.hbm [shape: f32[320,2048], index: 0, kind: input, shape index: {}]
  %s1 = inlined_call_operand.hbm [shape: f32[320,2048], index: 1, kind: output, shape index: {}]
  %s2 = sld [smem:[#allocation0]]
  $region41: #{tpu_custom_call.1} parent=0
    _
  %s4 = ssub.s32 1, %s2
  %s5 = scalar_select 0, %s4, %s2
  $region1: #{tpu_custom_call.1} parent=0
    #allocation2 [shape = 'u8[655360]{0}', space=vmem, size = 0xa0000, scoped, tag = 'input window, operand 0']
    #allocation3 [shape = 's32[2]{0}', space=sflag, size = 0x8, scoped, tag = 'scoped memory for tpu_custom_call.1']
    #allocation4 [shape = 's32[2]{0}', space=sflag, size = 0x8, scoped, tag = 'scoped memory for tpu_custom_call.1']
    #allocation5 [shape = 'u8[655360]{0}', space=vmem, size = 0xa0000, scoped, tag = 'output window, operand 0']
    %6 = vsyncpa [#allocation3], 0
    %s7 = scalar_lea.sflag [#allocation3], 1
    %8 = vsyncpa %s7, 0
    %9 = vsyncpa [#allocation4], 0
    %s10 = scalar_lea.sflag [#allocation4], 1
    %11 = vsyncpa %s10, 0
    loop: start=0, step=1, limit=10
    $region2: #{tpu_custom_call.1} parent=1 // loop_pre_header
      _
    $region3: #{tpu_custom_call.1} parent=1 // loop_header
      %s13 = sphi 0, %s17
      %p14 = scmp.ge.s32.totalorder %s13, 10
      %s23 = sphi 0, %s25
      %s26 = sphi 0, %s23
      %s27 = sphi 0, %s26
      %s43 = sphi 0, %s27
      %s49 = sphi 0, %s51
      %s52 = sphi 0, %s49
      %s53 = sphi 0, %s52
      %s69 = sphi 0, %s53
    $region4: #{tpu_custom_call.1} parent=1 // loop_header_branch
      %16 = sbr.rel (%p14) target = $region8
    $region5: #{tpu_custom_call.1} parent=1 // loop_body
      %s18 = ssub.s32 %s13, 1
      %s19 = ssub.s32 %s13, 2
      %s20 = sadd.s32 %s13, 1
      %s21 = ssub.s32 %s13, %s20
      %p22 = scmp.eq.s32.totalorder %s21, 0
      %s24 = sadd.s32 %s23, 1
      %s25 = scalar_select %p22, %s23, %s24
      %p28 = pneg %p22
      %p29 = scmp.eq.s32.totalorder %s13, 7
      %p30 = por %p28, %p29
      %p31 = scmp.ne.s32.totalorder %s23, %s26
      %p32 = scmp.eq.s32.totalorder %s13, 0
      %p33 = por %p31, %p32
      %p34 = scmp.ne.s32.totalorder %s23, %s26
      %p35 = scmp.eq.s32.totalorder %s18, 7
      %p36 = por %p34, %p35
      %p37 = scmp.ne.s32.totalorder %s26, %s27
      %p38 = scmp.eq.s32.totalorder %s18, 0
      %p39 = por %p37, %p38
      %p40 = scmp.ne.s32.totalorder %s26, %s27
      %p41 = scmp.eq.s32.totalorder %s19, 7
      %p42 = por %p40, %p41
      %p44 = scmp.ne.s32.totalorder %s27, %s43
      %p45 = scmp.eq.s32.totalorder %s19, 0
      %p46 = por %p44, %p45
      %s47 = ssub.s32 %s13, %s20
      %p48 = scmp.eq.s32.totalorder %s47, 0
      %s50 = sadd.s32 %s49, 1
      %s51 = scalar_select %p48, %s49, %s50
      %p54 = pneg %p48
      %p55 = scmp.eq.s32.totalorder %s13, 7
      %p56 = por %p54, %p55
      %p57 = scmp.ne.s32.totalorder %s49, %s52
      %p58 = scmp.eq.s32.totalorder %s13, 0
      %p59 = por %p57, %p58
      %p60 = scmp.ne.s32.totalorder %s49, %s52
      %p61 = scmp.eq.s32.totalorder %s18, 7
      %p62 = por %p60, %p61
      %p63 = scmp.ne.s32.totalorder %s52, %s53
      %p64 = scmp.eq.s32.totalorder %s18, 0
      %p65 = por %p63, %p64
      %p66 = scmp.ne.s32.totalorder %s52, %s53
      %p67 = scmp.eq.s32.totalorder %s19, 7
      %p68 = por %p66, %p67
      %p70 = scmp.ne.s32.totalorder %s53, %s69
      %p71 = scmp.eq.s32.totalorder %s19, 0
      %p72 = por %p70, %p71
      %p73 = scmp.le.s32.totalorder 1, %s13
      %p74 = scmp.lt.s32.totalorder %s13, 9
      %p75 = pnand %p73, %p74
      %p76 = pneg %p75
      // Predicated region
      $region9: #{tpu_custom_call.1} parent=5 // pred_check
        _
      $region10: #{tpu_custom_call.1} parent=5 // pred_check_branch
        %78 = sbr.rel (%p75) target = $region12
      $region11: #{tpu_custom_call.1} parent=5 // pred_region
        %s79 = ssub.s32 %s13, 1
      $region12: #{tpu_custom_call.1} parent=5 // pred_fallthru
        _
      %p80 = scmp.lt.s32.totalorder %s13, 8
      // Predicated region
      $region13: #{tpu_custom_call.1} parent=5 // pred_check
        %p81 = pneg %p80
      $region14: #{tpu_custom_call.1} parent=5 // pred_check_branch
        %83 = sbr.rel (%p81) target = $region16
      $region15: #{tpu_custom_call.1} parent=5 // pred_region
        // Predicated region
        $region17: #{tpu_custom_call.1} parent=15 // pred_check
          %p84 = pneg %p33
        $region18: #{tpu_custom_call.1} parent=15 // pred_check_branch
          %86 = sbr.rel (%p84) target = $region20
        $region19: #{tpu_custom_call.1} parent=15 // pred_region
          %s87 = sand.u32 %s23, 1
          %s88 = scalar_lea.sflag [#allocation3], %s87
          %s89 = sand.u32 %s23, 1
          %s90 = smul.addr %s89, 640
          %s91 = scalar_lea.vmem [#allocation2], %s90
          %s92 = smul.u32 5, %s13
          %s94 = ssub.s32 10240, 10240
          %95 = vsyncadd %s88, %s94
          %s96 = smul.addr %s92, 16
          %s97 = smul.addr %s96, 128
          %s98 = scalar_lea.hbm %s0, %s97
          %s99 = sshll.u32 %s91, 4
          %s100 = int_to_ptr.vmem [resolvable:$true] %s99
          %105 = dma.hbm_to_vmem [thread:$0]  %s98, 10240, %s100, %s88, 2048, 2048, 128
        $region20: #{tpu_custom_call.1} parent=15 // pred_fallthru
          _
      $region16: #{tpu_custom_call.1} parent=5 // pred_fallthru
        _
      %p106 = scmp.le.s32.totalorder 1, %s13
      %p107 = scmp.lt.s32.totalorder %s13, 9
      %p108 = pnand %p106, %p107
      %p109 = pneg %p108
      // Predicated region
      $region21: #{tpu_custom_call.1} parent=5 // pred_check
        _
      $region22: #{tpu_custom_call.1} parent=5 // pred_check_branch
        %111 = sbr.rel (%p108) target = $region24
      $region23: #{tpu_custom_call.1} parent=5 // pred_region
        %s112 = ssub.s32 %s13, 1
        %s113 = sand.u32 %s26, 1
        %s114 = scalar_lea.sflag [#allocation3], %s113
        %s115 = sand.u32 %s26, 1
        %s116 = smul.addr %s115, 640
        %s117 = scalar_lea.vmem [#allocation2], %s116
        // Predicated region
        $region25: #{tpu_custom_call.1} parent=23 // pred_check
          %p118 = pneg %p39
        $region26: #{tpu_custom_call.1} parent=23 // pred_check_branch
          %120 = sbr.rel (%p118) target = $region28
        $region27: #{tpu_custom_call.1} parent=23 // pred_region
          %121 = dma.done %s114, 10240
        $region28: #{tpu_custom_call.1} parent=23 // pred_fallthru
          _
        %s122 = sand.u32 %s26, 1
        %s123 = scalar_lea.sflag [#allocation3], %s122
        %s124 = sand.u32 %s26, 1
        %s125 = smul.addr %s124, 640
        %s126 = scalar_lea.vmem [#allocation2], %s125
        %p127 = pneg %p39
        %p128 = pneg %p36
        %p129 = pneg %p65
        %p130 = pneg %p62
        %s131 = sand.u32 %s52, 1
        %s132 = scalar_lea.sflag [#allocation4], %s131
        %s133 = sand.u32 %s52, 1
        %s134 = smul.addr %s133, 640
        %s135 = scalar_lea.vmem [#allocation5], %s134
        %s136 = smul.u32 5, %s18
        %s137 = smul.u32 5, %s18
        %v138 = vld [vmem:[%s117] sm:$0xff]
        %v139 = vld [vmem:[%s117 + $0x8] sm:$0xff]
        %v140 = vld [vmem:[%s117 + $0x10] sm:$0xff]
        %v141 = vld [vmem:[%s117 + $0x18] sm:$0xff]
        %v142 = vld [vmem:[%s117 + $0x20] sm:$0xff]
        %v143 = vld [vmem:[%s117 + $0x28] sm:$0xff]
        %v144 = vld [vmem:[%s117 + $0x30] sm:$0xff]
        %v145 = vld [vmem:[%s117 + $0x38] sm:$0xff]
        %v146 = vld [vmem:[%s117 + $0x40] sm:$0xff]
        %v147 = vld [vmem:[%s117 + $0x48] sm:$0xff]
        %v148 = vld [vmem:[%s117 + $0x50] sm:$0xff]
        %v149 = vld [vmem:[%s117 + $0x58] sm:$0xff]
        %v150 = vld [vmem:[%s117 + $0x60] sm:$0xff]
        %v151 = vld [vmem:[%s117 + $0x68] sm:$0xff]
        %v152 = vld [vmem:[%s117 + $0x70] sm:$0xff]
        %v153 = vld [vmem:[%s117 + $0x78] sm:$0xff]
        %v154 = vld [vmem:[%s117 + $0x80] sm:$0xff]
        %v155 = vld [vmem:[%s117 + $0x88] sm:$0xff]
        %v156 = vld [vmem:[%s117 + $0x90] sm:$0xff]
        %v157 = vld [vmem:[%s117 + $0x98] sm:$0xff]
        %v158 = vld [vmem:[%s117 + $0xa0] sm:$0xff]
        %v159 = vld [vmem:[%s117 + $0xa8] sm:$0xff]
        %v160 = vld [vmem:[%s117 + $0xb0] sm:$0xff]
        %v161 = vld [vmem:[%s117 + $0xb8] sm:$0xff]
        %v162 = vld [vmem:[%s117 + $0xc0] sm:$0xff]
        %v163 = vld [vmem:[%s117 + $0xc8] sm:$0xff]
        %v164 = vld [vmem:[%s117 + $0xd0] sm:$0xff]
        %v165 = vld [vmem:[%s117 + $0xd8] sm:$0xff]
        %v166 = vld [vmem:[%s117 + $0xe0] sm:$0xff]
        %v167 = vld [vmem:[%s117 + $0xe8] sm:$0xff]
        %v168 = vld [vmem:[%s117 + $0xf0] sm:$0xff]
        %v169 = vld [vmem:[%s117 + $0xf8] sm:$0xff]
        %v170 = vld [vmem:[%s117 + $0x100] sm:$0xff]
        %v171 = vld [vmem:[%s117 + $0x108] sm:$0xff]
        %v172 = vld [vmem:[%s117 + $0x110] sm:$0xff]
        %v173 = vld [vmem:[%s117 + $0x118] sm:$0xff]
        %v174 = vld [vmem:[%s117 + $0x120] sm:$0xff]
        %v175 = vld [vmem:[%s117 + $0x128] sm:$0xff]
        %v176 = vld [vmem:[%s117 + $0x130] sm:$0xff]
        %v177 = vld [vmem:[%s117 + $0x138] sm:$0xff]
        %v178 = vld [vmem:[%s117 + $0x140] sm:$0xff]
        %v179 = vld [vmem:[%s117 + $0x148] sm:$0xff]
        %v180 = vld [vmem:[%s117 + $0x150] sm:$0xff]
        %v181 = vld [vmem:[%s117 + $0x158] sm:$0xff]
        %v182 = vld [vmem:[%s117 + $0x160] sm:$0xff]
        %v183 = vld [vmem:[%s117 + $0x168] sm:$0xff]
        %v184 = vld [vmem:[%s117 + $0x170] sm:$0xff]
        %v185 = vld [vmem:[%s117 + $0x178] sm:$0xff]
        %v186 = vld [vmem:[%s117 + $0x180] sm:$0xff]
        %v187 = vld [vmem:[%s117 + $0x188] sm:$0xff]
        %v188 = vld [vmem:[%s117 + $0x190] sm:$0xff]
        %v189 = vld [vmem:[%s117 + $0x198] sm:$0xff]
        %v190 = vld [vmem:[%s117 + $0x1a0] sm:$0xff]
        %v191 = vld [vmem:[%s117 + $0x1a8] sm:$0xff]
        %v192 = vld [vmem:[%s117 + $0x1b0] sm:$0xff]
        %v193 = vld [vmem:[%s117 + $0x1b8] sm:$0xff]
        %v194 = vld [vmem:[%s117 + $0x1c0] sm:$0xff]
        %v195 = vld [vmem:[%s117 + $0x1c8] sm:$0xff]
        %v196 = vld [vmem:[%s117 + $0x1d0] sm:$0xff]
        %v197 = vld [vmem:[%s117 + $0x1d8] sm:$0xff]
        %v198 = vld [vmem:[%s117 + $0x1e0] sm:$0xff]
        %v199 = vld [vmem:[%s117 + $0x1e8] sm:$0xff]
        %v200 = vld [vmem:[%s117 + $0x1f0] sm:$0xff]
        %v201 = vld [vmem:[%s117 + $0x1f8] sm:$0xff]
        %v202 = vld [vmem:[%s117 + $0x200] sm:$0xff]
        %v203 = vld [vmem:[%s117 + $0x208] sm:$0xff]
        %v204 = vld [vmem:[%s117 + $0x210] sm:$0xff]
        %v205 = vld [vmem:[%s117 + $0x218] sm:$0xff]
        %v206 = vld [vmem:[%s117 + $0x220] sm:$0xff]
        %v207 = vld [vmem:[%s117 + $0x228] sm:$0xff]
        %v208 = vld [vmem:[%s117 + $0x230] sm:$0xff]
        %v209 = vld [vmem:[%s117 + $0x238] sm:$0xff]
        %v210 = vld [vmem:[%s117 + $0x240] sm:$0xff]
        %v211 = vld [vmem:[%s117 + $0x248] sm:$0xff]
        %v212 = vld [vmem:[%s117 + $0x250] sm:$0xff]
        %v213 = vld [vmem:[%s117 + $0x258] sm:$0xff]
        %v214 = vld [vmem:[%s117 + $0x260] sm:$0xff]
        %v215 = vld [vmem:[%s117 + $0x268] sm:$0xff]
        %v216 = vld [vmem:[%s117 + $0x270] sm:$0xff]
        %v217 = vld [vmem:[%s117 + $0x278] sm:$0xff]
        %v218 = vsub.f32 %v138, 0.1
        %v219 = vsub.f32 %v139, 0.1
        %v220 = vsub.f32 %v140, 0.1
        %v221 = vsub.f32 %v141, 0.1
        %v222 = vsub.f32 %v142, 0.1
        %v223 = vsub.f32 %v143, 0.1
        %v224 = vsub.f32 %v144, 0.1
        %v225 = vsub.f32 %v145, 0.1
        %v226 = vsub.f32 %v146, 0.1
        %v227 = vsub.f32 %v147, 0.1
        %v228 = vsub.f32 %v148, 0.1
        %v229 = vsub.f32 %v149, 0.1
        %v230 = vsub.f32 %v150, 0.1
        %v231 = vsub.f32 %v151, 0.1
        %v232 = vsub.f32 %v152, 0.1
        %v233 = vsub.f32 %v153, 0.1
        %v234 = vsub.f32 %v154, 0.1
        %v235 = vsub.f32 %v155, 0.1
        %v236 = vsub.f32 %v156, 0.1
        %v237 = vsub.f32 %v157, 0.1
        %v238 = vsub.f32 %v158, 0.1
        %v239 = vsub.f32 %v159, 0.1
        %v240 = vsub.f32 %v160, 0.1
        %v241 = vsub.f32 %v161, 0.1
        %v242 = vsub.f32 %v162, 0.1
        %v243 = vsub.f32 %v163, 0.1
        %v244 = vsub.f32 %v164, 0.1
        %v245 = vsub.f32 %v165, 0.1
        %v246 = vsub.f32 %v166, 0.1
        %v247 = vsub.f32 %v167, 0.1
        %v248 = vsub.f32 %v168, 0.1
        %v249 = vsub.f32 %v169, 0.1
        %v250 = vsub.f32 %v170, 0.1
        %v251 = vsub.f32 %v171, 0.1
        %v252 = vsub.f32 %v172, 0.1
        %v253 = vsub.f32 %v173, 0.1
        %v254 = vsub.f32 %v174, 0.1
        %v255 = vsub.f32 %v175, 0.1
        %v256 = vsub.f32 %v176, 0.1
        %v257 = vsub.f32 %v177, 0.1
        %v258 = vsub.f32 %v178, 0.1
        %v259 = vsub.f32 %v179, 0.1
        %v260 = vsub.f32 %v180, 0.1
        %v261 = vsub.f32 %v181, 0.1
        %v262 = vsub.f32 %v182, 0.1
        %v263 = vsub.f32 %v183, 0.1
        %v264 = vsub.f32 %v184, 0.1
        %v265 = vsub.f32 %v185, 0.1
        %v266 = vsub.f32 %v186, 0.1
        %v267 = vsub.f32 %v187, 0.1
        %v268 = vsub.f32 %v188, 0.1
        %v269 = vsub.f32 %v189, 0.1
        %v270 = vsub.f32 %v190, 0.1
        %v271 = vsub.f32 %v191, 0.1
        %v272 = vsub.f32 %v192, 0.1
        %v273 = vsub.f32 %v193, 0.1
        %v274 = vsub.f32 %v194, 0.1
        %v275 = vsub.f32 %v195, 0.1
        %v276 = vsub.f32 %v196, 0.1
        %v277 = vsub.f32 %v197, 0.1
        %v278 = vsub.f32 %v198, 0.1
        %v279 = vsub.f32 %v199, 0.1
        %v280 = vsub.f32 %v200, 0.1
        %v281 = vsub.f32 %v201, 0.1
        %v282 = vsub.f32 %v202, 0.1
        %v283 = vsub.f32 %v203, 0.1
        %v284 = vsub.f32 %v204, 0.1
        %v285 = vsub.f32 %v205, 0.1
        %v286 = vsub.f32 %v206, 0.1
        %v287 = vsub.f32 %v207, 0.1
        %v288 = vsub.f32 %v208, 0.1
        %v289 = vsub.f32 %v209, 0.1
        %v290 = vsub.f32 %v210, 0.1
        %v291 = vsub.f32 %v211, 0.1
        %v292 = vsub.f32 %v212, 0.1
        %v293 = vsub.f32 %v213, 0.1
        %v294 = vsub.f32 %v214, 0.1
        %v295 = vsub.f32 %v215, 0.1
        %v296 = vsub.f32 %v216, 0.1
        %v297 = vsub.f32 %v217, 0.1
        %v298 = vmul.f32 %v218, 3.3333333
        %v299 = vmul.f32 %v219, 3.3333333
        %v300 = vmul.f32 %v220, 3.3333333
        %v301 = vmul.f32 %v221, 3.3333333
        %v302 = vmul.f32 %v222, 3.3333333
        %v303 = vmul.f32 %v223, 3.3333333
        %v304 = vmul.f32 %v224, 3.3333333
        %v305 = vmul.f32 %v225, 3.3333333
        %v306 = vmul.f32 %v226, 3.3333333
        %v307 = vmul.f32 %v227, 3.3333333
        %v308 = vmul.f32 %v228, 3.3333333
        %v309 = vmul.f32 %v229, 3.3333333
        %v310 = vmul.f32 %v230, 3.3333333
        %v311 = vmul.f32 %v231, 3.3333333
        %v312 = vmul.f32 %v232, 3.3333333
        %v313 = vmul.f32 %v233, 3.3333333
        %v314 = vmul.f32 %v234, 3.3333333
        %v315 = vmul.f32 %v235, 3.3333333
        %v316 = vmul.f32 %v236, 3.3333333
        %v317 = vmul.f32 %v237, 3.3333333
        %v318 = vmul.f32 %v238, 3.3333333
        %v319 = vmul.f32 %v239, 3.3333333
        %v320 = vmul.f32 %v240, 3.3333333
        %v321 = vmul.f32 %v241, 3.3333333
        %v322 = vmul.f32 %v242, 3.3333333
        %v323 = vmul.f32 %v243, 3.3333333
        %v324 = vmul.f32 %v244, 3.3333333
        %v325 = vmul.f32 %v245, 3.3333333
        %v326 = vmul.f32 %v246, 3.3333333
        %v327 = vmul.f32 %v247, 3.3333333
        %v328 = vmul.f32 %v248, 3.3333333
        %v329 = vmul.f32 %v249, 3.3333333
        %v330 = vmul.f32 %v250, 3.3333333
        %v331 = vmul.f32 %v251, 3.3333333
        %v332 = vmul.f32 %v252, 3.3333333
        %v333 = vmul.f32 %v253, 3.3333333
        %v334 = vmul.f32 %v254, 3.3333333
        %v335 = vmul.f32 %v255, 3.3333333
        %v336 = vmul.f32 %v256, 3.3333333
        %v337 = vmul.f32 %v257, 3.3333333
        %v338 = vmul.f32 %v258, 3.3333333
        %v339 = vmul.f32 %v259, 3.3333333
        %v340 = vmul.f32 %v260, 3.3333333
        %v341 = vmul.f32 %v261, 3.3333333
        %v342 = vmul.f32 %v262, 3.3333333
        %v343 = vmul.f32 %v263, 3.3333333
        %v344 = vmul.f32 %v264, 3.3333333
        %v345 = vmul.f32 %v265, 3.3333333
        %v346 = vmul.f32 %v266, 3.3333333
        %v347 = vmul.f32 %v267, 3.3333333
        %v348 = vmul.f32 %v268, 3.3333333
        %v349 = vmul.f32 %v269, 3.3333333
        %v350 = vmul.f32 %v270, 3.3333333
        %v351 = vmul.f32 %v271, 3.3333333
        %v352 = vmul.f32 %v272, 3.3333333
        %v353 = vmul.f32 %v273, 3.3333333
        %v354 = vmul.f32 %v274, 3.3333333
        %v355 = vmul.f32 %v275, 3.3333333
        %v356 = vmul.f32 %v276, 3.3333333
        %v357 = vmul.f32 %v277, 3.3333333
        %v358 = vmul.f32 %v278, 3.3333333
        %v359 = vmul.f32 %v279, 3.3333333
        %v360 = vmul.f32 %v280, 3.3333333
        %v361 = vmul.f32 %v281, 3.3333333
        %v362 = vmul.f32 %v282, 3.3333333
        %v363 = vmul.f32 %v283, 3.3333333
        %v364 = vmul.f32 %v284, 3.3333333
        %v365 = vmul.f32 %v285, 3.3333333
        %v366 = vmul.f32 %v286, 3.3333333
        %v367 = vmul.f32 %v287, 3.3333333
        %v368 = vmul.f32 %v288, 3.3333333
        %v369 = vmul.f32 %v289, 3.3333333
        %v370 = vmul.f32 %v290, 3.3333333
        %v371 = vmul.f32 %v291, 3.3333333
        %v372 = vmul.f32 %v292, 3.3333333
        %v373 = vmul.f32 %v293, 3.3333333
        %v374 = vmul.f32 %v294, 3.3333333
        %v375 = vmul.f32 %v295, 3.3333333
        %v376 = vmul.f32 %v296, 3.3333333
        %v377 = vmul.f32 %v297, 3.3333333
        %v378 = vsub.f32 0.9, %v138
        %v379 = vsub.f32 0.9, %v139
        %v380 = vsub.f32 0.9, %v140
        %v381 = vsub.f32 0.9, %v141
        %v382 = vsub.f32 0.9, %v142
        %v383 = vsub.f32 0.9, %v143
        %v384 = vsub.f32 0.9, %v144
        %v385 = vsub.f32 0.9, %v145
        %v386 = vsub.f32 0.9, %v146
        %v387 = vsub.f32 0.9, %v147
        %v388 = vsub.f32 0.9, %v148
        %v389 = vsub.f32 0.9, %v149
        %v390 = vsub.f32 0.9, %v150
        %v391 = vsub.f32 0.9, %v151
        %v392 = vsub.f32 0.9, %v152
        %v393 = vsub.f32 0.9, %v153
        %v394 = vsub.f32 0.9, %v154
        %v395 = vsub.f32 0.9, %v155
        %v396 = vsub.f32 0.9, %v156
        %v397 = vsub.f32 0.9, %v157
        %v398 = vsub.f32 0.9, %v158
        %v399 = vsub.f32 0.9, %v159
        %v400 = vsub.f32 0.9, %v160
        %v401 = vsub.f32 0.9, %v161
        %v402 = vsub.f32 0.9, %v162
        %v403 = vsub.f32 0.9, %v163
        %v404 = vsub.f32 0.9, %v164
        %v405 = vsub.f32 0.9, %v165
        %v406 = vsub.f32 0.9, %v166
        %v407 = vsub.f32 0.9, %v167
        %v408 = vsub.f32 0.9, %v168
        %v409 = vsub.f32 0.9, %v169
        %v410 = vsub.f32 0.9, %v170
        %v411 = vsub.f32 0.9, %v171
        %v412 = vsub.f32 0.9, %v172
        %v413 = vsub.f32 0.9, %v173
        %v414 = vsub.f32 0.9, %v174
        %v415 = vsub.f32 0.9, %v175
        %v416 = vsub.f32 0.9, %v176
        %v417 = vsub.f32 0.9, %v177
        %v418 = vsub.f32 0.9, %v178
        %v419 = vsub.f32 0.9, %v179
        %v420 = vsub.f32 0.9, %v180
        %v421 = vsub.f32 0.9, %v181
        %v422 = vsub.f32 0.9, %v182
        %v423 = vsub.f32 0.9, %v183
        %v424 = vsub.f32 0.9, %v184
        %v425 = vsub.f32 0.9, %v185
        %v426 = vsub.f32 0.9, %v186
        %v427 = vsub.f32 0.9, %v187
        %v428 = vsub.f32 0.9, %v188
        %v429 = vsub.f32 0.9, %v189
        %v430 = vsub.f32 0.9, %v190
        %v431 = vsub.f32 0.9, %v191
        %v432 = vsub.f32 0.9, %v192
        %v433 = vsub.f32 0.9, %v193
        %v434 = vsub.f32 0.9, %v194
        %v435 = vsub.f32 0.9, %v195
        %v436 = vsub.f32 0.9, %v196
        %v437 = vsub.f32 0.9, %v197
        %v438 = vsub.f32 0.9, %v198
        %v439 = vsub.f32 0.9, %v199
        %v440 = vsub.f32 0.9, %v200
        %v441 = vsub.f32 0.9, %v201
        %v442 = vsub.f32 0.9, %v202
        %v443 = vsub.f32 0.9, %v203
        %v444 = vsub.f32 0.9, %v204
        %v445 = vsub.f32 0.9, %v205
        %v446 = vsub.f32 0.9, %v206
        %v447 = vsub.f32 0.9, %v207
        %v448 = vsub.f32 0.9, %v208
        %v449 = vsub.f32 0.9, %v209
        %v450 = vsub.f32 0.9, %v210
        %v451 = vsub.f32 0.9, %v211
        %v452 = vsub.f32 0.9, %v212
        %v453 = vsub.f32 0.9, %v213
        %v454 = vsub.f32 0.9, %v214
        %v455 = vsub.f32 0.9, %v215
        %v456 = vsub.f32 0.9, %v216
        %v457 = vsub.f32 0.9, %v217
        %v458 = vmul.f32 %v378, 3.3333333
        %v459 = vmul.f32 %v379, 3.3333333
        %v460 = vmul.f32 %v380, 3.3333333
        %v461 = vmul.f32 %v381, 3.3333333
        %v462 = vmul.f32 %v382, 3.3333333
        %v463 = vmul.f32 %v383, 3.3333333
        %v464 = vmul.f32 %v384, 3.3333333
        %v465 = vmul.f32 %v385, 3.3333333
        %v466 = vmul.f32 %v386, 3.3333333
        %v467 = vmul.f32 %v387, 3.3333333
        %v468 = vmul.f32 %v388, 3.3333333
        %v469 = vmul.f32 %v389, 3.3333333
        %v470 = vmul.f32 %v390, 3.3333333
        %v471 = vmul.f32 %v391, 3.3333333
        %v472 = vmul.f32 %v392, 3.3333333
        %v473 = vmul.f32 %v393, 3.3333333
        %v474 = vmul.f32 %v394, 3.3333333
        %v475 = vmul.f32 %v395, 3.3333333
        %v476 = vmul.f32 %v396, 3.3333333
        %v477 = vmul.f32 %v397, 3.3333333
        %v478 = vmul.f32 %v398, 3.3333333
        %v479 = vmul.f32 %v399, 3.3333333
        %v480 = vmul.f32 %v400, 3.3333333
        %v481 = vmul.f32 %v401, 3.3333333
        %v482 = vmul.f32 %v402, 3.3333333
        %v483 = vmul.f32 %v403, 3.3333333
        %v484 = vmul.f32 %v404, 3.3333333
        %v485 = vmul.f32 %v405, 3.3333333
        %v486 = vmul.f32 %v406, 3.3333333
        %v487 = vmul.f32 %v407, 3.3333333
        %v488 = vmul.f32 %v408, 3.3333333
        %v489 = vmul.f32 %v409, 3.3333333
        %v490 = vmul.f32 %v410, 3.3333333
        %v491 = vmul.f32 %v411, 3.3333333
        %v492 = vmul.f32 %v412, 3.3333333
        %v493 = vmul.f32 %v413, 3.3333333
        %v494 = vmul.f32 %v414, 3.3333333
        %v495 = vmul.f32 %v415, 3.3333333
        %v496 = vmul.f32 %v416, 3.3333333
        %v497 = vmul.f32 %v417, 3.3333333
        %v498 = vmul.f32 %v418, 3.3333333
        %v499 = vmul.f32 %v419, 3.3333333
        %v500 = vmul.f32 %v420, 3.3333333
        %v501 = vmul.f32 %v421, 3.3333333
        %v502 = vmul.f32 %v422, 3.3333333
        %v503 = vmul.f32 %v423, 3.3333333
        %v504 = vmul.f32 %v424, 3.3333333
        %v505 = vmul.f32 %v425, 3.3333333
        %v506 = vmul.f32 %v426, 3.3333333
        %v507 = vmul.f32 %v427, 3.3333333
        %v508 = vmul.f32 %v428, 3.3333333
        %v509 = vmul.f32 %v429, 3.3333333
        %v510 = vmul.f32 %v430, 3.3333333
        %v511 = vmul.f32 %v431, 3.3333333
        %v512 = vmul.f32 %v432, 3.3333333
        %v513 = vmul.f32 %v433, 3.3333333
        %v514 = vmul.f32 %v434, 3.3333333
        %v515 = vmul.f32 %v435, 3.3333333
        %v516 = vmul.f32 %v436, 3.3333333
        %v517 = vmul.f32 %v437, 3.3333333
        %v518 = vmul.f32 %v438, 3.3333333
        %v519 = vmul.f32 %v439, 3.3333333
        %v520 = vmul.f32 %v440, 3.3333333
        %v521 = vmul.f32 %v441, 3.3333333
        %v522 = vmul.f32 %v442, 3.3333333
        %v523 = vmul.f32 %v443, 3.3333333
        %v524 = vmul.f32 %v444, 3.3333333
        %v525 = vmul.f32 %v445, 3.3333333
        %v526 = vmul.f32 %v446, 3.3333333
        %v527 = vmul.f32 %v447, 3.3333333
        %v528 = vmul.f32 %v448, 3.3333333
        %v529 = vmul.f32 %v449, 3.3333333
        %v530 = vmul.f32 %v450, 3.3333333
        %v531 = vmul.f32 %v451, 3.3333333
        %v532 = vmul.f32 %v452, 3.3333333
        %v533 = vmul.f32 %v453, 3.3333333
        %v534 = vmul.f32 %v454, 3.3333333
        %v535 = vmul.f32 %v455, 3.3333333
        %v536 = vmul.f32 %v456, 3.3333333
        %v537 = vmul.f32 %v457, 3.3333333
        %v538 = vmin.f32 %v298, %v458
        %v539 = vmin.f32 %v299, %v459
        %v540 = vmin.f32 %v300, %v460
        %v541 = vmin.f32 %v301, %v461
        %v542 = vmin.f32 %v302, %v462
        %v543 = vmin.f32 %v303, %v463
        %v544 = vmin.f32 %v304, %v464
        %v545 = vmin.f32 %v305, %v465
        %v546 = vmin.f32 %v306, %v466
        %v547 = vmin.f32 %v307, %v467
        %v548 = vmin.f32 %v308, %v468
        %v549 = vmin.f32 %v309, %v469
        %v550 = vmin.f32 %v310, %v470
        %v551 = vmin.f32 %v311, %v471
        %v552 = vmin.f32 %v312, %v472
        %v553 = vmin.f32 %v313, %v473
        %v554 = vmin.f32 %v314, %v474
        %v555 = vmin.f32 %v315, %v475
        %v556 = vmin.f32 %v316, %v476
        %v557 = vmin.f32 %v317, %v477
        %v558 = vmin.f32 %v318, %v478
        %v559 = vmin.f32 %v319, %v479
        %v560 = vmin.f32 %v320, %v480
        %v561 = vmin.f32 %v321, %v481
        %v562 = vmin.f32 %v322, %v482
        %v563 = vmin.f32 %v323, %v483
        %v564 = vmin.f32 %v324, %v484
        %v565 = vmin.f32 %v325, %v485
        %v566 = vmin.f32 %v326, %v486
        %v567 = vmin.f32 %v327, %v487
        %v568 = vmin.f32 %v328, %v488
        %v569 = vmin.f32 %v329, %v489
        %v570 = vmin.f32 %v330, %v490
        %v571 = vmin.f32 %v331, %v491
        %v572 = vmin.f32 %v332, %v492
        %v573 = vmin.f32 %v333, %v493
        %v574 = vmin.f32 %v334, %v494
        %v575 = vmin.f32 %v335, %v495
        %v576 = vmin.f32 %v336, %v496
        %v577 = vmin.f32 %v337, %v497
        %v578 = vmin.f32 %v338, %v498
        %v579 = vmin.f32 %v339, %v499
        %v580 = vmin.f32 %v340, %v500
        %v581 = vmin.f32 %v341, %v501
        %v582 = vmin.f32 %v342, %v502
        %v583 = vmin.f32 %v343, %v503
        %v584 = vmin.f32 %v344, %v504
        %v585 = vmin.f32 %v345, %v505
        %v586 = vmin.f32 %v346, %v506
        %v587 = vmin.f32 %v347, %v507
        %v588 = vmin.f32 %v348, %v508
        %v589 = vmin.f32 %v349, %v509
        %v590 = vmin.f32 %v350, %v510
        %v591 = vmin.f32 %v351, %v511
        %v592 = vmin.f32 %v352, %v512
        %v593 = vmin.f32 %v353, %v513
        %v594 = vmin.f32 %v354, %v514
        %v595 = vmin.f32 %v355, %v515
        %v596 = vmin.f32 %v356, %v516
        %v597 = vmin.f32 %v357, %v517
        %v598 = vmin.f32 %v358, %v518
        %v599 = vmin.f32 %v359, %v519
        %v600 = vmin.f32 %v360, %v520
        %v601 = vmin.f32 %v361, %v521
        %v602 = vmin.f32 %v362, %v522
        %v603 = vmin.f32 %v363, %v523
        %v604 = vmin.f32 %v364, %v524
        %v605 = vmin.f32 %v365, %v525
        %v606 = vmin.f32 %v366, %v526
        %v607 = vmin.f32 %v367, %v527
        %v608 = vmin.f32 %v368, %v528
        %v609 = vmin.f32 %v369, %v529
        %v610 = vmin.f32 %v370, %v530
        %v611 = vmin.f32 %v371, %v531
        %v612 = vmin.f32 %v372, %v532
        %v613 = vmin.f32 %v373, %v533
        %v614 = vmin.f32 %v374, %v534
        %v615 = vmin.f32 %v375, %v535
        %v616 = vmin.f32 %v376, %v536
        %v617 = vmin.f32 %v377, %v537
        %v618 = vmax.f32 %v538, 0.0
        %v619 = vmax.f32 %v539, 0.0
        %v620 = vmax.f32 %v540, 0.0
        %v621 = vmax.f32 %v541, 0.0
        %v622 = vmax.f32 %v542, 0.0
        %v623 = vmax.f32 %v543, 0.0
        %v624 = vmax.f32 %v544, 0.0
        %v625 = vmax.f32 %v545, 0.0
        %v626 = vmax.f32 %v546, 0.0
        %v627 = vmax.f32 %v547, 0.0
        %v628 = vmax.f32 %v548, 0.0
        %v629 = vmax.f32 %v549, 0.0
        %v630 = vmax.f32 %v550, 0.0
        %v631 = vmax.f32 %v551, 0.0
        %v632 = vmax.f32 %v552, 0.0
        %v633 = vmax.f32 %v553, 0.0
        %v634 = vmax.f32 %v554, 0.0
        %v635 = vmax.f32 %v555, 0.0
        %v636 = vmax.f32 %v556, 0.0
        %v637 = vmax.f32 %v557, 0.0
        %v638 = vmax.f32 %v558, 0.0
        %v639 = vmax.f32 %v559, 0.0
        %v640 = vmax.f32 %v560, 0.0
        %v641 = vmax.f32 %v561, 0.0
        %v642 = vmax.f32 %v562, 0.0
        %v643 = vmax.f32 %v563, 0.0
        %v644 = vmax.f32 %v564, 0.0
        %v645 = vmax.f32 %v565, 0.0
        %v646 = vmax.f32 %v566, 0.0
        %v647 = vmax.f32 %v567, 0.0
        %v648 = vmax.f32 %v568, 0.0
        %v649 = vmax.f32 %v569, 0.0
        %v650 = vmax.f32 %v570, 0.0
        %v651 = vmax.f32 %v571, 0.0
        %v652 = vmax.f32 %v572, 0.0
        %v653 = vmax.f32 %v573, 0.0
        %v654 = vmax.f32 %v574, 0.0
        %v655 = vmax.f32 %v575, 0.0
        %v656 = vmax.f32 %v576, 0.0
        %v657 = vmax.f32 %v577, 0.0
        %v658 = vmax.f32 %v578, 0.0
        %v659 = vmax.f32 %v579, 0.0
        %v660 = vmax.f32 %v580, 0.0
        %v661 = vmax.f32 %v581, 0.0
        %v662 = vmax.f32 %v582, 0.0
        %v663 = vmax.f32 %v583, 0.0
        %v664 = vmax.f32 %v584, 0.0
        %v665 = vmax.f32 %v585, 0.0
        %v666 = vmax.f32 %v586, 0.0
        %v667 = vmax.f32 %v587, 0.0
        %v668 = vmax.f32 %v588, 0.0
        %v669 = vmax.f32 %v589, 0.0
        %v670 = vmax.f32 %v590, 0.0
        %v671 = vmax.f32 %v591, 0.0
        %v672 = vmax.f32 %v592, 0.0
        %v673 = vmax.f32 %v593, 0.0
        %v674 = vmax.f32 %v594, 0.0
        %v675 = vmax.f32 %v595, 0.0
        %v676 = vmax.f32 %v596, 0.0
        %v677 = vmax.f32 %v597, 0.0
        %v678 = vmax.f32 %v598, 0.0
        %v679 = vmax.f32 %v599, 0.0
        %v680 = vmax.f32 %v600, 0.0
        %v681 = vmax.f32 %v601, 0.0
        %v682 = vmax.f32 %v602, 0.0
        %v683 = vmax.f32 %v603, 0.0
        %v684 = vmax.f32 %v604, 0.0
        %v685 = vmax.f32 %v605, 0.0
        %v686 = vmax.f32 %v606, 0.0
        %v687 = vmax.f32 %v607, 0.0
        %v688 = vmax.f32 %v608, 0.0
        %v689 = vmax.f32 %v609, 0.0
        %v690 = vmax.f32 %v610, 0.0
        %v691 = vmax.f32 %v611, 0.0
        %v692 = vmax.f32 %v612, 0.0
        %v693 = vmax.f32 %v613, 0.0
        %v694 = vmax.f32 %v614, 0.0
        %v695 = vmax.f32 %v615, 0.0
        %v696 = vmax.f32 %v616, 0.0
        %v697 = vmax.f32 %v617, 0.0
        %698 = vst [vmem:[%s135] sm:$0xff] %v618
        %699 = vst [vmem:[%s135 + $0x8] sm:$0xff] %v619
        %700 = vst [vmem:[%s135 + $0x10] sm:$0xff] %v620
        %701 = vst [vmem:[%s135 + $0x18] sm:$0xff] %v621
        %702 = vst [vmem:[%s135 + $0x20] sm:$0xff] %v622
        %703 = vst [vmem:[%s135 + $0x28] sm:$0xff] %v623
        %704 = vst [vmem:[%s135 + $0x30] sm:$0xff] %v624
        %705 = vst [vmem:[%s135 + $0x38] sm:$0xff] %v625
        %706 = vst [vmem:[%s135 + $0x40] sm:$0xff] %v626
        %707 = vst [vmem:[%s135 + $0x48] sm:$0xff] %v627
        %708 = vst [vmem:[%s135 + $0x50] sm:$0xff] %v628
        %709 = vst [vmem:[%s135 + $0x58] sm:$0xff] %v629
        %710 = vst [vmem:[%s135 + $0x60] sm:$0xff] %v630
        %711 = vst [vmem:[%s135 + $0x68] sm:$0xff] %v631
        %712 = vst [vmem:[%s135 + $0x70] sm:$0xff] %v632
        %713 = vst [vmem:[%s135 + $0x78] sm:$0xff] %v633
        %714 = vst [vmem:[%s135 + $0x80] sm:$0xff] %v634
        %715 = vst [vmem:[%s135 + $0x88] sm:$0xff] %v635
        %716 = vst [vmem:[%s135 + $0x90] sm:$0xff] %v636
        %717 = vst [vmem:[%s135 + $0x98] sm:$0xff] %v637
        %718 = vst [vmem:[%s135 + $0xa0] sm:$0xff] %v638
        %719 = vst [vmem:[%s135 + $0xa8] sm:$0xff] %v639
        %720 = vst [vmem:[%s135 + $0xb0] sm:$0xff] %v640
        %721 = vst [vmem:[%s135 + $0xb8] sm:$0xff] %v641
        %722 = vst [vmem:[%s135 + $0xc0] sm:$0xff] %v642
        %723 = vst [vmem:[%s135 + $0xc8] sm:$0xff] %v643
        %724 = vst [vmem:[%s135 + $0xd0] sm:$0xff] %v644
        %725 = vst [vmem:[%s135 + $0xd8] sm:$0xff] %v645
        %726 = vst [vmem:[%s135 + $0xe0] sm:$0xff] %v646
        %727 = vst [vmem:[%s135 + $0xe8] sm:$0xff] %v647
        %728 = vst [vmem:[%s135 + $0xf0] sm:$0xff] %v648
        %729 = vst [vmem:[%s135 + $0xf8] sm:$0xff] %v649
        %730 = vst [vmem:[%s135 + $0x100] sm:$0xff] %v650
        %731 = vst [vmem:[%s135 + $0x108] sm:$0xff] %v651
        %732 = vst [vmem:[%s135 + $0x110] sm:$0xff] %v652
        %733 = vst [vmem:[%s135 + $0x118] sm:$0xff] %v653
        %734 = vst [vmem:[%s135 + $0x120] sm:$0xff] %v654
        %735 = vst [vmem:[%s135 + $0x128] sm:$0xff] %v655
        %736 = vst [vmem:[%s135 + $0x130] sm:$0xff] %v656
        %737 = vst [vmem:[%s135 + $0x138] sm:$0xff] %v657
        %738 = vst [vmem:[%s135 + $0x140] sm:$0xff] %v658
        %739 = vst [vmem:[%s135 + $0x148] sm:$0xff] %v659
        %740 = vst [vmem:[%s135 + $0x150] sm:$0xff] %v660
        %741 = vst [vmem:[%s135 + $0x158] sm:$0xff] %v661
        %742 = vst [vmem:[%s135 + $0x160] sm:$0xff] %v662
        %743 = vst [vmem:[%s135 + $0x168] sm:$0xff] %v663
        %744 = vst [vmem:[%s135 + $0x170] sm:$0xff] %v664
        %745 = vst [vmem:[%s135 + $0x178] sm:$0xff] %v665
        %746 = vst [vmem:[%s135 + $0x180] sm:$0xff] %v666
        %747 = vst [vmem:[%s135 + $0x188] sm:$0xff] %v667
        %748 = vst [vmem:[%s135 + $0x190] sm:$0xff] %v668
        %749 = vst [vmem:[%s135 + $0x198] sm:$0xff] %v669
        %750 = vst [vmem:[%s135 + $0x1a0] sm:$0xff] %v670
        %751 = vst [vmem:[%s135 + $0x1a8] sm:$0xff] %v671
        %752 = vst [vmem:[%s135 + $0x1b0] sm:$0xff] %v672
        %753 = vst [vmem:[%s135 + $0x1b8] sm:$0xff] %v673
        %754 = vst [vmem:[%s135 + $0x1c0] sm:$0xff] %v674
        %755 = vst [vmem:[%s135 + $0x1c8] sm:$0xff] %v675
        %756 = vst [vmem:[%s135 + $0x1d0] sm:$0xff] %v676
        %757 = vst [vmem:[%s135 + $0x1d8] sm:$0xff] %v677
        %758 = vst [vmem:[%s135 + $0x1e0] sm:$0xff] %v678
        %759 = vst [vmem:[%s135 + $0x1e8] sm:$0xff] %v679
        %760 = vst [vmem:[%s135 + $0x1f0] sm:$0xff] %v680
        %761 = vst [vmem:[%s135 + $0x1f8] sm:$0xff] %v681
        %762 = vst [vmem:[%s135 + $0x200] sm:$0xff] %v682
        %763 = vst [vmem:[%s135 + $0x208] sm:$0xff] %v683
        %764 = vst [vmem:[%s135 + $0x210] sm:$0xff] %v684
        %765 = vst [vmem:[%s135 + $0x218] sm:$0xff] %v685
        %766 = vst [vmem:[%s135 + $0x220] sm:$0xff] %v686
        %767 = vst [vmem:[%s135 + $0x228] sm:$0xff] %v687
        %768 = vst [vmem:[%s135 + $0x230] sm:$0xff] %v688
        %769 = vst [vmem:[%s135 + $0x238] sm:$0xff] %v689
        %770 = vst [vmem:[%s135 + $0x240] sm:$0xff] %v690
        %771 = vst [vmem:[%s135 + $0x248] sm:$0xff] %v691
        %772 = vst [vmem:[%s135 + $0x250] sm:$0xff] %v692
        %773 = vst [vmem:[%s135 + $0x258] sm:$0xff] %v693
        %774 = vst [vmem:[%s135 + $0x260] sm:$0xff] %v694
        %775 = vst [vmem:[%s135 + $0x268] sm:$0xff] %v695
        %776 = vst [vmem:[%s135 + $0x270] sm:$0xff] %v696
        %777 = vst [vmem:[%s135 + $0x278] sm:$0xff] %v697
        %s778 = sand.u32 %s52, 1
        %s779 = scalar_lea.sflag [#allocation4], %s778
        %s780 = sand.u32 %s52, 1
        %s781 = smul.addr %s780, 640
        %s782 = scalar_lea.vmem [#allocation5], %s781
        // Predicated region
        $region29: #{tpu_custom_call.1} parent=23 // pred_check
          %p783 = pneg %p62
        $region30: #{tpu_custom_call.1} parent=23 // pred_check_branch
          %785 = sbr.rel (%p783) target = $region32
        $region31: #{tpu_custom_call.1} parent=23 // pred_region
          %s786 = smul.u32 5, %s18
          %s788 = ssub.s32 10240, 10240
          %789 = vsyncadd %s779, %s788
          %s790 = smul.addr %s786, 16
          %s791 = smul.addr %s790, 128
          %s792 = scalar_lea.hbm %s1, %s791
          %s793 = sshll.u32 %s782, 4
          %s794 = int_to_ptr.vmem [resolvable:$true] %s793
          %799 = dma.vmem_to_hbm [thread:$0]  %s794, 10240, %s792, %s779, 2048, 2048, 128
        $region32: #{tpu_custom_call.1} parent=23 // pred_fallthru
          _
      $region24: #{tpu_custom_call.1} parent=5 // pred_fallthru
        _
      %p800 = scmp.le.s32.totalorder 2, %s13
      // Predicated region
      $region33: #{tpu_custom_call.1} parent=5 // pred_check
        %p801 = pneg %p800
      $region34: #{tpu_custom_call.1} parent=5 // pred_check_branch
        %803 = sbr.rel (%p801) target = $region36
      $region35: #{tpu_custom_call.1} parent=5 // pred_region
        %s804 = ssub.s32 %s13, 2
        // Predicated region
        $region37: #{tpu_custom_call.1} parent=35 // pred_check
          %p805 = pneg %p68
        $region38: #{tpu_custom_call.1} parent=35 // pred_check_branch
          %807 = sbr.rel (%p805) target = $region40
        $region39: #{tpu_custom_call.1} parent=35 // pred_region
          %s808 = sand.u32 %s53, 1
          %s809 = scalar_lea.sflag [#allocation4], %s808
          %s810 = sand.u32 %s53, 1
          %s811 = smul.addr %s810, 640
          %s812 = scalar_lea.vmem [#allocation5], %s811
          %813 = dma.done %s809, 10240
        $region40: #{tpu_custom_call.1} parent=35 // pred_fallthru
          _
      $region36: #{tpu_custom_call.1} parent=5 // pred_fallthru
        _
    $region6: #{tpu_custom_call.1} parent=1 // loop_footer
      %s17 = sadd.s32 1, %s13
    $region7: #{tpu_custom_call.1} parent=1 // loop_footer_branch
      %12 = sbr.rel target = $region3
    $region8: #{tpu_custom_call.1} parent=1 // loop_exit
      _
    %814 = vsyncpa [#allocation3], 1
    %s815 = scalar_lea.sflag [#allocation3], 1
    %816 = vsyncpa %s815, 1
    %817 = vsyncpa [#allocation4], 1
    %s818 = scalar_lea.sflag [#allocation4], 1
    %819 = vsyncpa %s818, 1

</llo_original>
